<compile_context>
chip_gen: v7x
topology: tpu7x:2x2x1
jax: 0.10.0
libtpu: 0.0.40
codegen_flags: <defaults>
</compile_context>

<pallas_src>
import functools

import jax
import jax.numpy as jnp
from jax.experimental import pallas as pl
from jax.experimental.pallas import tpu as pltpu

LANE = 128
HIDDEN = 256


def _round_up(n, m):
    return ((n + m - 1) // m) * m


def vae_encoder_kernel(x_ref, eps_ref, w1_ref, b1_ref, wh_ref, bh_ref,
                       out_ref, *, latent):
    """Fused VariationalEncoder forward for one batch tile.

    x_ref   : (bm, K)         input tile (K = input_shape, unpadded)
    eps_ref : (bm, latent)    U[0,1) noise (torch.rand_like semantics)
    w1_ref  : (K, 256)        fc1 weight stored (in, out)
    b1_ref  : (1, 256)
    wh_ref  : (256, 2*latent) fused head weight  [Wmu | Wlv]
    bh_ref  : (1, 2*latent)   fused head bias    [bmu | blv]
    out_ref : (bm, OW)        packed lane-dense output [mu | logvar | z | 0-pad]
    """
    x = x_ref[...]

    # fc1 + ReLU (MXU, f32 accumulate)
    h = jnp.dot(x, w1_ref[...], preferred_element_type=jnp.float32)
    h = jnp.maximum(h + b1_ref[...], 0.0)                        # (bm, 256)

    # Fused heads: one matmul produces [mu | logvar]
    heads = jnp.dot(h, wh_ref[...], preferred_element_type=jnp.float32)
    heads = heads + bh_ref[...]                                  # (bm, 2*latent)

    mu = heads[:, :latent]
    logvar = heads[:, latent:]

    # Reparameterise: z = eps * exp(0.5*logvar) + mu, eps ~ U[0,1)
    z = eps_ref[...] * jnp.exp(0.5 * logvar) + mu

    # Single lane-dense packed store: [mu | logvar | z | 0-pad to 128 lanes]
    parts = [mu, logvar, z]
    pad_w = out_ref.shape[1] - 3 * latent
    if pad_w:
        parts.append(jnp.zeros((x.shape[0], pad_w), jnp.float32))
    out_ref[...] = jnp.concatenate(parts, axis=-1)


def prepare_params(w1, b1, wmu, bmu, wlv, blv):
    """One-time parameter prep (hoisted out of the per-call forward path)."""
    wh = jnp.concatenate([wmu, wlv], axis=1)   # (256, 2*latent)
    bh = jnp.concatenate([bmu, blv], axis=1)   # (1,   2*latent)
    return (w1, b1, wh, bh)


@jax.jit
def variational_encoder_forward(x, params, key):
    """Returns (mu, logvar, z), matching VariationalEncoder.forward."""
    w1, b1, wh, bh = params
    B, d_in = x.shape
    latent = wh.shape[1] // 2
    out_w = _round_up(3 * latent, LANE)

    # Batch tile: large enough to amortize the ~0.35us/step fixed overhead on
    # v5e/v6e, but keep >= 2 grid steps at large B so the "parallel" batch axis
    # can shard across v7x's two TensorCores.  No batch padding needed.
    bm = max(8, min(1024, _round_up(pl.cdiv(B, 2), 8)))
    grid = (pl.cdiv(B, bm),)

    # eps ~ U[0, 1)  (torch.rand_like semantics)
    eps = jax.random.uniform(key, (B, latent), jnp.float32)

    vmem_full = pl.BlockSpec(memory_space=pltpu.MemorySpace.VMEM)

    packed = pl.pallas_call(
        functools.partial(vae_encoder_kernel, latent=latent),
        out_shape=jax.ShapeDtypeStruct((B, out_w), jnp.float32),
        grid=grid,
        in_specs=[
            pl.BlockSpec((bm, d_in), lambda i: (i, 0)),      # x tile
            pl.BlockSpec((bm, latent), lambda i: (i, 0)),    # eps tile
            vmem_full,                                       # w1 (resident)
            vmem_full,                                       # b1
            vmem_full,                                       # W_heads
            vmem_full,                                       # b_heads
        ],
        out_specs=pl.BlockSpec((bm, out_w), lambda i: (i, 0)),
        compiler_params=pltpu.CompilerParams(
            dimension_semantics=("parallel",)),
    )(x, eps, w1, b1, wh, bh)

    mu = packed[:, :latent]
    logvar = packed[:, latent:2 * latent]
    z = packed[:, 2 * latent:3 * latent]
    return mu, logvar, z


def init_params(key, input_shape, hidden, latent_shape):
    """Deterministic PyTorch-Linear-style (uniform +/- 1/sqrt(fan_in)) init."""
    def linear(k, fan_in, fan_out):
        kw, kb = jax.random.split(k)
        bound = 1.0 / jnp.sqrt(fan_in)
        # stored as (in, out) so the kernel computes x @ W
        w = jax.random.uniform(kw, (fan_in, fan_out), jnp.float32, -bound, bound)
        b = jax.random.uniform(kb, (1, fan_out), jnp.float32, -bound, bound)
        return w, b

    k1, k2, k3 = jax.random.split(key, 3)
    w1, b1 = linear(k1, input_shape, hidden)
    wmu, bmu = linear(k2, hidden, latent_shape)
    wlv, blv = linear(k3, hidden, latent_shape)
    return w1, b1, wmu, bmu, wlv, blv


if __name__ == "__main__":
    INPUT_SHAPE = 64     # self.input_shape
    LATENT_SHAPE = 32    # self.latent_shape
    BATCH = 8

    key = jax.random.PRNGKey(0)
    kx, kparams, keps = jax.random.split(key, 3)

    x = jax.random.normal(kx, (BATCH, INPUT_SHAPE), jnp.float32)
    w1, b1, wmu, bmu, wlv, blv = init_params(kparams, INPUT_SHAPE, HIDDEN,
                                             LATENT_SHAPE)
    params = prepare_params(w1, b1, wmu, bmu, wlv, blv)   # one-time prep

    mu, logvar, z = variational_encoder_forward(x, params, keps)
    jax.block_until_ready((mu, logvar, z))

    # Pure-JAX reference (same eps key -> exact reparameterisation check).
    h_ref = jnp.maximum(x @ w1 + b1, 0.0)
    mu_ref = h_ref @ wmu + bmu
    lv_ref = h_ref @ wlv + blv
    eps_ref = jax.random.uniform(keps, (BATCH, LATENT_SHAPE), jnp.float32)
    z_ref = eps_ref * jnp.exp(0.5 * lv_ref) + mu_ref

    assert mu.shape == (BATCH, LATENT_SHAPE)
    assert logvar.shape == (BATCH, LATENT_SHAPE)
    assert z.shape == (BATCH, LATENT_SHAPE)
    assert jnp.allclose(mu, mu_ref, atol=1e-4, rtol=1e-4)
    assert jnp.allclose(logvar, lv_ref, atol=1e-4, rtol=1e-4)
    assert jnp.allclose(z, z_ref, atol=1e-4, rtol=1e-4)

    print("KERNEL_OK")
</pallas_src>

<mosaic_0001>
module attributes {stable_mosaic.version = 11 : i64} {
  func.func @vae_encoder_kernel(%arg0: i32, %arg1: memref<8x64xf32, #tpu.memory_space<vmem>>, %arg2: memref<8x32xf32, #tpu.memory_space<vmem>>, %arg3: memref<64x256xf32, #tpu.memory_space<vmem>>, %arg4: memref<1x256xf32, #tpu.memory_space<vmem>>, %arg5: memref<256x64xf32, #tpu.memory_space<vmem>>, %arg6: memref<1x64xf32, #tpu.memory_space<vmem>>, %arg7: memref<8x128xf32, #tpu.memory_space<vmem>>) attributes {dimension_semantics = [#tpu.dimension_semantics<parallel>], iteration_bounds = array<i64: 1>, scalar_prefetch = 0 : i64, scratch_operands = 0 : i64, tpu.core_type = #tpu.core_type<tc>, window_params = [{transform_indices = @transform_0, window_bounds = array<i64: 8, 64>}, {transform_indices = @transform_1, window_bounds = array<i64: 8, 32>}, {pipeline_mode = #tpu.pipeline_mode<synchronous>, transform_indices = @transform_2, window_bounds = array<i64: 64, 256>}, {pipeline_mode = #tpu.pipeline_mode<synchronous>, transform_indices = @transform_3, window_bounds = array<i64: 1, 256>}, {pipeline_mode = #tpu.pipeline_mode<synchronous>, transform_indices = @transform_4, window_bounds = array<i64: 256, 64>}, {pipeline_mode = #tpu.pipeline_mode<synchronous>, transform_indices = @transform_5, window_bounds = array<i64: 1, 64>}, {transform_indices = @transform_6, window_bounds = array<i64: 8, 128>}]} {
    %c0 = arith.constant 0 : index
    %c0_0 = arith.constant 0 : index
    %0 = vector.load %arg1[%c0, %c0_0] : memref<8x64xf32, #tpu.memory_space<vmem>>, vector<8x64xf32>
    %c0_1 = arith.constant 0 : index
    %c0_2 = arith.constant 0 : index
    %1 = vector.load %arg3[%c0_1, %c0_2] : memref<64x256xf32, #tpu.memory_space<vmem>>, vector<64x256xf32>
    %cst = arith.constant dense<0.000000e+00> : vector<8x256xf32>
    %2 = tpu.matmul %0, %1, %cst {dimension_numbers = #tpu.dot_dimension_numbers<[1], [0], [0], [1], [0, 0, 1, 1], [], []>} : vector<8x64xf32>, vector<64x256xf32>, vector<8x256xf32> -> vector<8x256xf32>
    %c0_3 = arith.constant 0 : index
    %c0_4 = arith.constant 0 : index
    %3 = vector.load %arg4[%c0_3, %c0_4] : memref<1x256xf32, #tpu.memory_space<vmem>>, vector<1x256xf32>
    %4 = vector.broadcast %3 : vector<1x256xf32> to vector<8x256xf32>
    %5 = arith.addf %2, %4 : vector<8x256xf32>
    %cst_5 = arith.constant 0.000000e+00 : f32
    %6 = vector.broadcast %cst_5 : f32 to vector<8x256xf32>
    %7 = arith.maximumf %5, %6 : vector<8x256xf32>
    %c0_6 = arith.constant 0 : index
    %c0_7 = arith.constant 0 : index
    %8 = vector.load %arg5[%c0_6, %c0_7] : memref<256x64xf32, #tpu.memory_space<vmem>>, vector<256x64xf32>
    %cst_8 = arith.constant dense<0.000000e+00> : vector<8x64xf32>
    %9 = tpu.matmul %7, %8, %cst_8 {dimension_numbers = #tpu.dot_dimension_numbers<[1], [0], [0], [1], [0, 0, 1, 1], [], []>} : vector<8x256xf32>, vector<256x64xf32>, vector<8x64xf32> -> vector<8x64xf32>
    %c0_9 = arith.constant 0 : index
    %c0_10 = arith.constant 0 : index
    %10 = vector.load %arg6[%c0_9, %c0_10] : memref<1x64xf32, #tpu.memory_space<vmem>>, vector<1x64xf32>
    %11 = vector.broadcast %10 : vector<1x64xf32> to vector<8x64xf32>
    %12 = arith.addf %9, %11 : vector<8x64xf32>
    %13 = vector.extract_strided_slice %12 {offsets = [0, 0], sizes = [8, 32], strides = [1, 1]} : vector<8x64xf32> to vector<8x32xf32>
    %14 = vector.extract_strided_slice %12 {offsets = [0, 32], sizes = [8, 32], strides = [1, 1]} : vector<8x64xf32> to vector<8x32xf32>
    %c0_11 = arith.constant 0 : index
    %c0_12 = arith.constant 0 : index
    %15 = vector.load %arg2[%c0_11, %c0_12] : memref<8x32xf32, #tpu.memory_space<vmem>>, vector<8x32xf32>
    %cst_13 = arith.constant 5.000000e-01 : f32
    %16 = vector.broadcast %cst_13 : f32 to vector<8x32xf32>
    %17 = arith.mulf %16, %14 : vector<8x32xf32>
    %18 = math.exp %17 : vector<8x32xf32>
    %19 = arith.mulf %15, %18 : vector<8x32xf32>
    %20 = arith.addf %19, %13 : vector<8x32xf32>
    %cst_14 = arith.constant 0.000000e+00 : f32
    %21 = vector.broadcast %cst_14 : f32 to vector<8x32xf32>
    %22 = tpu.concatenate %13, %14, %20, %21 in 1 : vector<8x32xf32>, vector<8x32xf32>, vector<8x32xf32>, vector<8x32xf32> -> vector<8x128xf32>
    %c0_15 = arith.constant 0 : index
    %c0_16 = arith.constant 0 : index
    %23 = vector.load %arg7[%c0_15, %c0_16] : memref<8x128xf32, #tpu.memory_space<vmem>>, vector<8x128xf32>
    tpu.vector_store %arg7[%c0_15, %c0_16], %22 {strides = array<i32>} : memref<8x128xf32, #tpu.memory_space<vmem>>, vector<8x128xf32>,
    return
  }
  func.func @transform_0(%arg0: i32) -> (i32, i32) {
    %c0_i32 = arith.constant 0 : i32
    %c0_i32_0 = arith.constant 0 : i32
    return %arg0, %c0_i32 : i32, i32
  }
  func.func @transform_1(%arg0: i32) -> (i32, i32) {
    %c0_i32 = arith.constant 0 : i32
    %c0_i32_0 = arith.constant 0 : i32
    return %arg0, %c0_i32 : i32, i32
  }
  func.func @transform_2(%arg0: i32) -> (i32, i32) {
    %c0_i32 = arith.constant 0 : i32
    %c0_i32_0 = arith.constant 0 : i32
    %c0_i32_1 = arith.constant 0 : i32
    return %c0_i32, %c0_i32_0 : i32, i32
  }
  func.func @transform_3(%arg0: i32) -> (i32, i32) {
    %c0_i32 = arith.constant 0 : i32
    %c0_i32_0 = arith.constant 0 : i32
    %c0_i32_1 = arith.constant 0 : i32
    return %c0_i32, %c0_i32_0 : i32, i32
  }
  func.func @transform_4(%arg0: i32) -> (i32, i32) {
    %c0_i32 = arith.constant 0 : i32
    %c0_i32_0 = arith.constant 0 : i32
    %c0_i32_1 = arith.constant 0 : i32
    return %c0_i32, %c0_i32_0 : i32, i32
  }
  func.func @transform_5(%arg0: i32) -> (i32, i32) {
    %c0_i32 = arith.constant 0 : i32
    %c0_i32_0 = arith.constant 0 : i32
    %c0_i32_1 = arith.constant 0 : i32
    return %c0_i32, %c0_i32_0 : i32, i32
  }
  func.func @transform_6(%arg0: i32) -> (i32, i32) {
    %c0_i32 = arith.constant 0 : i32
    %c0_i32_0 = arith.constant 0 : i32
    return %arg0, %c0_i32 : i32, i32
  }
}

</mosaic_0001>

<llo_original>
// kernel: variational_encoder_forward.1
$region0: #{variational_encoder_forward.1}
  #allocation0 [shape = 'u32[]', space=smem, size = 0x4, offset = 0x4, fixed_abs, tag = 'smem constant byte address 0x4 - core index']
  #allocation1 [shape = 'u32[144,128]{1,0:T(1,128)}', space=vmem, size = 0x12000, scoped, tag = 'internal scratch']
  %s0 = inlined_call_operand.vmem [shape: f32[8,64], index: 0, kind: input, shape index: {}]
  %s1 = inlined_call_operand.vmem [shape: f32[8,32], index: 1, kind: input, shape index: {}]
  %s2 = inlined_call_operand.vmem [shape: f32[64,256], index: 2, kind: input, shape index: {}]
  %s3 = inlined_call_operand.vmem [shape: f32[1,256], index: 3, kind: input, shape index: {}]
  %s4 = inlined_call_operand.vmem [shape: f32[256,64], index: 4, kind: input, shape index: {}]
  %s5 = inlined_call_operand.vmem [shape: f32[1,64], index: 5, kind: input, shape index: {}]
  %s6 = inlined_call_operand.vmem [shape: f32[8,128], index: 6, kind: output, shape index: {}]
  %s7 = sld [smem:[#allocation0]]
  $region34: #{variational_encoder_forward.1} parent=0
    _
  %s9 = ssub.s32 1, %s7
  %s10 = scalar_select 0, %s9, %s7
  // Predicated region
  $region2: #{variational_encoder_forward.1} parent=0 // pred_check
    _
  $region3: #{variational_encoder_forward.1} parent=0 // pred_check_branch
    %12 = sbr.rel (0) target = $region5
  $region4: #{variational_encoder_forward.1} parent=0 // pred_region
    _
  $region5: #{variational_encoder_forward.1} parent=0 // pred_fallthru
    _
  // Predicated region
  $region6: #{variational_encoder_forward.1} parent=0 // pred_check
    _
  $region7: #{variational_encoder_forward.1} parent=0 // pred_check_branch
    %14 = sbr.rel (0) target = $region9
  $region8: #{variational_encoder_forward.1} parent=0 // pred_region
    _
  $region9: #{variational_encoder_forward.1} parent=0 // pred_fallthru
    _
  // Predicated region
  $region10: #{variational_encoder_forward.1} parent=0 // pred_check
    _
  $region11: #{variational_encoder_forward.1} parent=0 // pred_check_branch
    %16 = sbr.rel (0) target = $region13
  $region12: #{variational_encoder_forward.1} parent=0 // pred_region
    _
  $region13: #{variational_encoder_forward.1} parent=0 // pred_fallthru
    _
  // Predicated region
  $region14: #{variational_encoder_forward.1} parent=0 // pred_check
    _
  $region15: #{variational_encoder_forward.1} parent=0 // pred_check_branch
    %18 = sbr.rel (0) target = $region17
  $region16: #{variational_encoder_forward.1} parent=0 // pred_region
    _
  $region17: #{variational_encoder_forward.1} parent=0 // pred_fallthru
    _
  // Predicated region
  $region18: #{variational_encoder_forward.1} parent=0 // pred_check
    _
  $region19: #{variational_encoder_forward.1} parent=0 // pred_check_branch
    %20 = sbr.rel (0) target = $region21
  $region20: #{variational_encoder_forward.1} parent=0 // pred_region
    _
  $region21: #{variational_encoder_forward.1} parent=0 // pred_fallthru
    _
  // Predicated region
  $region22: #{variational_encoder_forward.1} parent=0 // pred_check
    _
  $region23: #{variational_encoder_forward.1} parent=0 // pred_check_branch
    %22 = sbr.rel (0) target = $region25
  $region24: #{variational_encoder_forward.1} parent=0 // pred_region
    _
  $region25: #{variational_encoder_forward.1} parent=0 // pred_fallthru
    _
  %v23 = vld [vmem:[%s0] sm:$0xff]
  %v24 = vld [vmem:[%s2] sm:$0xff]
  %v25 = vld [vmem:[%s2 + $0x8] sm:$0xff]
  %v26 = vld [vmem:[%s2 + $0x10] sm:$0xff]
  %v27 = vld [vmem:[%s2 + $0x18] sm:$0xff]
  %v28 = vld [vmem:[%s2 + $0x20] sm:$0xff]
  %v29 = vld [vmem:[%s2 + $0x28] sm:$0xff]
  %v30 = vld [vmem:[%s2 + $0x30] sm:$0xff]
  %v31 = vld [vmem:[%s2 + $0x38] sm:$0xff]
  %v32 = vld [vmem:[%s2 + $0x40] sm:$0xff]
  %v33 = vld [vmem:[%s2 + $0x48] sm:$0xff]
  %v34 = vld [vmem:[%s2 + $0x50] sm:$0xff]
  %v35 = vld [vmem:[%s2 + $0x58] sm:$0xff]
  %v36 = vld [vmem:[%s2 + $0x60] sm:$0xff]
  %v37 = vld [vmem:[%s2 + $0x68] sm:$0xff]
  %v38 = vld [vmem:[%s2 + $0x70] sm:$0xff]
  %v39 = vld [vmem:[%s2 + $0x78] sm:$0xff]
  %v40 = vld [vmem:[%s3] sm:$0x3]
  %v42 = vlaneseq
  %v43 = vshrl.u32 %v42, 7
  %v44 = vsub.s32 0, %v43
  %v45 = vrot.slane %v40, %v44
  %v46 = vlaneseq
  %v47 = vshrl.u32 %v46, 7
  %v48 = vsub.s32 1, %v47
  %v49 = vrot.slane %v40, %v48
  %vm52 = vcmask 523264
  %v54 = vsel %vm52, %v23, 0
  %56 = vmatprep.subr.mxu0 %v25
  %57 = vmatpush1.msra.mxu0 %v24
  %58 = vmatprep.subr.mxu0 %v27
  %59 = vmatpush1.msra.mxu0 %v26
  %60 = vmatprep.subr.mxu0 %v29
  %61 = vmatpush1.msra.mxu0 %v28
  %62 = vmatprep.subr.mxu0 %v31
  %63 = vmatpush1.msra.mxu0 %v30
  %64 = vmatprep.subr.mxu0 %v33
  %65 = vmatpush1.msra.mxu0 %v32
  %66 = vmatprep.subr.mxu0 %v35
  %67 = vmatpush1.msra.mxu0 %v34
  %68 = vmatprep.subr.mxu0 %v37
  %69 = vmatpush1.msra.mxu0 %v36
  %70 = vmatprep.subr.mxu0 %v39
  %71 = vmatpush1.msra.mxu0 %v38
  %72 = vmatprep.subr.mxu0 0.0
  %73 = vmatpush1.msra.mxu0 0.0
  %74 = vmatprep.subr.mxu0 0.0
  %75 = vmatpush1.msra.mxu0 0.0
  %76 = vmatprep.subr.mxu0 0.0
  %77 = vmatpush1.msra.mxu0 0.0
  %78 = vmatprep.subr.mxu0 0.0
  %79 = vmatpush1.msra.mxu0 0.0
  %80 = vmatprep.subr.mxu0 0.0
  %81 = vmatpush1.msra.mxu0 0.0
  %82 = vmatprep.subr.mxu0 0.0
  %83 = vmatpush1.msra.mxu0 0.0
  %84 = vmatprep.subr.mxu0 0.0
  %85 = vmatpush1.msra.mxu0 0.0
  %86 = vmatprep.subr.mxu0 0.0
  %87 = vmatpush1.msra.mxu0 0.0
  %88 = vmatprep.subr.mxu0 0.0
  %89 = vmatpush1.msra.mxu0 0.0
  %90 = vmatprep.subr.mxu0 0.0
  %91 = vmatpush1.msra.mxu0 0.0
  %92 = vmatprep.subr.mxu0 0.0
  %93 = vmatpush1.msra.mxu0 0.0
  %94 = vmatprep.subr.mxu0 0.0
  %95 = vmatpush1.msra.mxu0 0.0
  %96 = vmatprep.subr.mxu0 0.0
  %97 = vmatpush1.msra.mxu0 0.0
  %98 = vmatprep.subr.mxu0 0.0
  %99 = vmatpush1.msra.mxu0 0.0
  %100 = vmatprep.subr.mxu0 0.0
  %101 = vmatpush1.msra.mxu0 0.0
  %102 = vmatprep.subr.mxu0 0.0
  %103 = vmatpush1.msra.mxu0 0.0
  %104 = vmatprep.subr.mxu0 0.0
  %105 = vmatpush1.msra.mxu0 0.0
  %106 = vmatprep.subr.mxu0 0.0
  %107 = vmatpush1.msra.mxu0 0.0
  %108 = vmatprep.subr.mxu0 0.0
  %109 = vmatpush1.msra.mxu0 0.0
  %110 = vmatprep.subr.mxu0 0.0
  %111 = vmatpush1.msra.mxu0 0.0
  %112 = vmatprep.subr.mxu0 0.0
  %113 = vmatpush1.msra.mxu0 0.0
  %114 = vmatprep.subr.mxu0 0.0
  %115 = vmatpush1.msra.mxu0 0.0
  %116 = vmatprep.subr.mxu0 0.0
  %117 = vmatpush1.msra.mxu0 0.0
  %118 = vmatprep.subr.mxu0 0.0
  %119 = vmatpush1.msra.mxu0 0.0
  %120 = vmatprep.mubr.f32.mxu0 0.0
  %121 = vmatmul.mubr.f32.gmra.mrb[0].mxu0 %v54
  %v122 = vpop.f32.mrb[0].mxu0
  %v123 = vadd.f32 %v45, %v122
  %v124 = vpop.f32.mrb[0].mxu0
  %v125 = vadd.f32 %v49, %v124
  %126 = vdwg.mxu0
  %v127 = vmax.f32 %v123, 0.0
  %v128 = vmax.f32 %v125, 0.0
  %v129 = vld [vmem:[%s4] sm:$0xff]
  %v130 = vld [vmem:[%s4 + $0x8] sm:$0xff]
  %v131 = vld [vmem:[%s4 + $0x10] sm:$0xff]
  %v132 = vld [vmem:[%s4 + $0x18] sm:$0xff]
  %v133 = vld [vmem:[%s4 + $0x20] sm:$0xff]
  %v134 = vld [vmem:[%s4 + $0x28] sm:$0xff]
  %v135 = vld [vmem:[%s4 + $0x30] sm:$0xff]
  %v136 = vld [vmem:[%s4 + $0x38] sm:$0xff]
  %v137 = vld [vmem:[%s4 + $0x40] sm:$0xff]
  %v138 = vld [vmem:[%s4 + $0x48] sm:$0xff]
  %v139 = vld [vmem:[%s4 + $0x50] sm:$0xff]
  %v140 = vld [vmem:[%s4 + $0x58] sm:$0xff]
  %v141 = vld [vmem:[%s4 + $0x60] sm:$0xff]
  %v142 = vld [vmem:[%s4 + $0x68] sm:$0xff]
  %v143 = vld [vmem:[%s4 + $0x70] sm:$0xff]
  %v144 = vld [vmem:[%s4 + $0x78] sm:$0xff]
  %v145 = vld [vmem:[%s4 + $0x80] sm:$0xff]
  %v146 = vld [vmem:[%s4 + $0x88] sm:$0xff]
  %v147 = vld [vmem:[%s4 + $0x90] sm:$0xff]
  %v148 = vld [vmem:[%s4 + $0x98] sm:$0xff]
  %v149 = vld [vmem:[%s4 + $0xa0] sm:$0xff]
  %v150 = vld [vmem:[%s4 + $0xa8] sm:$0xff]
  %v151 = vld [vmem:[%s4 + $0xb0] sm:$0xff]
  %v152 = vld [vmem:[%s4 + $0xb8] sm:$0xff]
  %v153 = vld [vmem:[%s4 + $0xc0] sm:$0xff]
  %v154 = vld [vmem:[%s4 + $0xc8] sm:$0xff]
  %v155 = vld [vmem:[%s4 + $0xd0] sm:$0xff]
  %v156 = vld [vmem:[%s4 + $0xd8] sm:$0xff]
  %v157 = vld [vmem:[%s4 + $0xe0] sm:$0xff]
  %v158 = vld [vmem:[%s4 + $0xe8] sm:$0xff]
  %v159 = vld [vmem:[%s4 + $0xf0] sm:$0xff]
  %v160 = vld [vmem:[%s4 + $0xf8] sm:$0xff]
  %v161 = vld [vmem:[%s5] sm:$0x1]
  %v163 = vlaneseq
  %v164 = vshrl.u32 %v163, 7
  %v165 = vsub.s32 0, %v164
  %v166 = vrot.slane %v161, %v165
  %168 = vmatprep.subr.mxu0 0.0
  %169 = vmatpush1.msra.mxu0 %v129
  %170 = vmatprep.subr.mxu0 0.0
  %171 = vmatpush1.msra.mxu0 %v130
  %172 = vmatprep.subr.mxu0 0.0
  %173 = vmatpush1.msra.mxu0 %v131
  %174 = vmatprep.subr.mxu0 0.0
  %175 = vmatpush1.msra.mxu0 %v132
  %176 = vmatprep.subr.mxu0 0.0
  %177 = vmatpush1.msra.mxu0 %v133
  %178 = vmatprep.subr.mxu0 0.0
  %179 = vmatpush1.msra.mxu0 %v134
  %180 = vmatprep.subr.mxu0 0.0
  %181 = vmatpush1.msra.mxu0 %v135
  %182 = vmatprep.subr.mxu0 0.0
  %183 = vmatpush1.msra.mxu0 %v136
  %184 = vmatprep.subr.mxu0 0.0
  %185 = vmatpush1.msra.mxu0 %v137
  %186 = vmatprep.subr.mxu0 0.0
  %187 = vmatpush1.msra.mxu0 %v138
  %188 = vmatprep.subr.mxu0 0.0
  %189 = vmatpush1.msra.mxu0 %v139
  %190 = vmatprep.subr.mxu0 0.0
  %191 = vmatpush1.msra.mxu0 %v140
  %192 = vmatprep.subr.mxu0 0.0
  %193 = vmatpush1.msra.mxu0 %v141
  %194 = vmatprep.subr.mxu0 0.0
  %195 = vmatpush1.msra.mxu0 %v142
  %196 = vmatprep.subr.mxu0 0.0
  %197 = vmatpush1.msra.mxu0 %v143
  %198 = vmatprep.subr.mxu0 0.0
  %199 = vmatpush1.msra.mxu0 %v144
  %200 = vmatprep.subr.mxu0 0.0
  %201 = vmatpush1.msra.mxu0 %v145
  %202 = vmatprep.subr.mxu0 0.0
  %203 = vmatpush1.msra.mxu0 %v146
  %204 = vmatprep.subr.mxu0 0.0
  %205 = vmatpush1.msra.mxu0 %v147
  %206 = vmatprep.subr.mxu0 0.0
  %207 = vmatpush1.msra.mxu0 %v148
  %208 = vmatprep.subr.mxu0 0.0
  %209 = vmatpush1.msra.mxu0 %v149
  %210 = vmatprep.subr.mxu0 0.0
  %211 = vmatpush1.msra.mxu0 %v150
  %212 = vmatprep.subr.mxu0 0.0
  %213 = vmatpush1.msra.mxu0 %v151
  %214 = vmatprep.subr.mxu0 0.0
  %215 = vmatpush1.msra.mxu0 %v152
  %216 = vmatprep.subr.mxu0 0.0
  %217 = vmatpush1.msra.mxu0 %v153
  %218 = vmatprep.subr.mxu0 0.0
  %219 = vmatpush1.msra.mxu0 %v154
  %220 = vmatprep.subr.mxu0 0.0
  %221 = vmatpush1.msra.mxu0 %v155
  %222 = vmatprep.subr.mxu0 0.0
  %223 = vmatpush1.msra.mxu0 %v156
  %224 = vmatprep.subr.mxu0 0.0
  %225 = vmatpush1.msra.mxu0 %v157
  %226 = vmatprep.subr.mxu0 0.0
  %227 = vmatpush1.msra.mxu0 %v158
  %228 = vmatprep.subr.mxu0 0.0
  %229 = vmatpush1.msra.mxu0 %v159
  %230 = vmatprep.subr.mxu0 0.0
  %231 = vmatpush1.msra.mxu0 %v160
  %232 = vmatprep.mubr.f32.mxu0 %v128
  %233 = vmatmul.mubr.f32.gmra.mrb[0].mxu0 %v127
  %v234 = vpop.f32.mrb[0].mxu0
  %v235 = vadd.f32 %v166, %v234
  %v236 = vpop.f32.mrb[0].mxu0
  %237 = vdwg.mxu0
  %v238 = vld [vmem:[%s1] sm:$0xff]
  %v239 = vmul.f32 %v235, 0.5
  %v240 = vmul.f32 %v239, 1.442695
  %v241 = vpow.pop %v240
  %243 = vrot.lane.b32.xlu0 %v241, 96
  %v244 = vpop.permute.xlu0 %243
  %v246 = vmul.f32 %v238, %v244
  %v247 = vadd.f32 %v246, %v235
  %249 = vrot.lane.b32.xlu0 %v247, 64
  %v250 = vpop.permute.xlu0 %249
  %v252 = vsel %vm52, %v235, %v250
  %vm253 = vcmask 785408
  %v254 = vsel %vm253, %v252, 0.0
  %255 = vst [vmem:[%s6] sm:$0xff] %v254
  // Predicated region
  $region26: #{variational_encoder_forward.1} parent=0 // pred_check
    _
  $region27: #{variational_encoder_forward.1} parent=0 // pred_check_branch
    %257 = sbr.rel (0) target = $region29
  $region28: #{variational_encoder_forward.1} parent=0 // pred_region
    _
  $region29: #{variational_encoder_forward.1} parent=0 // pred_fallthru
    _
  // Predicated region
  $region30: #{variational_encoder_forward.1} parent=0 // pred_check
    _
  $region31: #{variational_encoder_forward.1} parent=0 // pred_check_branch
    %259 = sbr.rel (0) target = $region33
  $region32: #{variational_encoder_forward.1} parent=0 // pred_region
    _
  $region33: #{variational_encoder_forward.1} parent=0 // pred_fallthru
    _

</llo_original>
